<compile_context>
chip_gen: v7x
topology: tpu7x:2x2x1
jax: 0.10.0
libtpu: 0.0.40
codegen_flags: <defaults>
</compile_context>

<pallas_src>
import numpy as np
import jax
import jax.numpy as jnp
from jax.experimental import pallas as pl
from jax.experimental.pallas import tpu as pltpu


# ----------------------------- Pallas kernel ------------------------------- #
def augment_kernel(x_ref, noise_ref, g0_ref, g1_ref, w0_ref, w1_ref, out_ref):
    """Fused jitter + permutation + magnitude-warp + time-warp.

    Permutation, magnitude curve and the 2-nonzeros-per-row time-warp interp
    are pre-folded into (g0, g1, w0, w1); the kernel does two lane gathers
    along T and a fused multiply-add.
    """
    shape = x_ref.shape
    T = shape[-1]
    r = int(np.prod(shape[:-1]))                              # (nb*C, T) view
    y = (x_ref[...] + noise_ref[...]).reshape(r, T)           # jitter
    g0 = g0_ref[...].reshape(r, T)
    g1 = g1_ref[...].reshape(r, T)
    v0 = jnp.take_along_axis(y, g0, axis=-1, mode="promise_in_bounds")
    v1 = jnp.take_along_axis(y, g1, axis=-1, mode="promise_in_bounds")
    out = w0_ref[...].reshape(r, T) * v0 + w1_ref[...].reshape(r, T) * v1
    out_ref[...] = out.reshape(shape).astype(out_ref.dtype)


def _pick_block_batch(N, cap=8):
    """Batch elements per grid step: amortize per-step overhead but keep >= 2
    grid steps so v7x can shard the 'parallel' axis across its 2 TensorCores."""
    target = max(1, min(cap, N // 2))
    nb = 1
    for d in range(1, target + 1):
        if N % d == 0:
            nb = d
    return nb


def augmenter_pallas(x_nct, noise, g0, g1, w0, w1, *, nb=None):
    N, C, T = x_nct.shape
    if nb is None:
        nb = _pick_block_batch(N)
    assert N % nb == 0, "batch block size must divide N"

    def blk():
        return pl.BlockSpec((nb, C, T), lambda i: (i, 0, 0))

    return pl.pallas_call(
        augment_kernel,
        out_shape=jax.ShapeDtypeStruct((N, C, T), x_nct.dtype),
        grid_spec=pltpu.PrefetchScalarGridSpec(
            num_scalar_prefetch=0,
            grid=(N // nb,),
            in_specs=[blk(), blk(), blk(), blk(), blk(), blk()],
            out_specs=blk(),
        ),
        compiler_params=pltpu.CompilerParams(dimension_semantics=("parallel",)),
    )(x_nct, noise, g0, g1, w0, w1)


# --------------------------- host-side precompute --------------------------- #
def _natural_cubic_spline_batch(xk, yk, xq):
    """Batched natural cubic spline: xk (K,), yk (B, K), xq (Q,) -> (B, Q).

    The knot x-grid is shared, so a single (K,K) system is solved for all
    B right-hand sides at once (no per-(n,c) Python-loop solves).
    """
    # TODO(synk): scipy's CubicSpline uses not-a-knot BCs; natural BCs are used
    #             here (same smooth-random-warp intent, tiny curve difference).
    K = xk.shape[0]
    h = np.diff(xk)
    A = np.zeros((K, K), np.float64)
    A[0, 0] = 1.0
    A[-1, -1] = 1.0
    for i in range(1, K - 1):
        A[i, i - 1] = h[i - 1]
        A[i, i] = 2.0 * (h[i - 1] + h[i])
        A[i, i + 1] = h[i]
    d = np.diff(yk, axis=-1) / h                     # (B, K-1)
    rhs = np.zeros_like(yk)
    rhs[:, 1:-1] = 6.0 * (d[:, 1:] - d[:, :-1])
    m = np.linalg.solve(A, rhs.T).T                  # (B, K)

    idx = np.clip(np.searchsorted(xk, xq, side="right") - 1, 0, K - 2)  # (Q,)
    x0, x1 = xk[idx], xk[idx + 1]
    hs = x1 - x0
    y0, y1 = yk[:, idx], yk[:, idx + 1]
    m0, m1 = m[:, idx], m[:, idx + 1]
    return ((m0 * (x1 - xq) ** 3 + m1 * (xq - x0) ** 3) / (6.0 * hs)
            + (y0 / hs - m0 * hs / 6.0) * (x1 - xq)
            + (y1 / hs - m1 * hs / 6.0) * (xq - x0))


def build_augmenter_operators(rng, N, C, T, *, perm=True, mag=True, time=True,
                              perm_max_seg=5, mag_std=0.2, mag_knot=4,
                              time_std=0.2, time_knot=4):
    """Fold permutation + magnitude-warp + time-warp into a sparse 2-tap op:
        out[n,c,t] = w0[n,c,t]*y[n,c,g0[n,c,t]] + w1[n,c,t]*y[n,c,g1[n,c,t]]
    Fully vectorized over (n, c); no dense (T,T) operators are materialized.
    """
    orig = np.arange(T, dtype=np.float64)
    B = N * C

    # --- segment permutation indices: y2[n,c,t] = y1[n,c,perm_idx[n,t]]
    perm_idx = np.tile(np.arange(T), (N, 1))
    if perm:
        num_segs = rng.integers(1, perm_max_seg, size=N)
        for n in range(N):
            if num_segs[n] > 1:
                splits = np.array_split(np.arange(T), num_segs[n])
                order = rng.permutation(len(splits))
                perm_idx[n] = np.concatenate([splits[j] for j in order])

    # --- magnitude warp: smooth multiplicative curve per (n, c)
    if mag:
        mag_steps = np.linspace(0.0, T - 1.0, num=mag_knot + 2)
        mag_knots = rng.normal(loc=1.0, scale=mag_std, size=(N, mag_knot + 2, C))
        mag_curve = _natural_cubic_spline_batch(
            mag_steps, np.transpose(mag_knots, (0, 2, 1)).reshape(B, -1), orig
        ).reshape(N, C, T)
    else:
        mag_curve = np.ones((N, C, T), np.float64)

    # --- time warp: warped source positions per (n, c) -> 2-tap lerp taps
    if time:
        tw_steps = np.linspace(0.0, T - 1.0, num=time_knot + 2)
        tw_knots = rng.normal(loc=1.0, scale=time_std, size=(N, time_knot + 2, C))
        tw_vals = tw_steps[None, :] * np.transpose(tw_knots, (0, 2, 1)).reshape(B, -1)
        tw = _natural_cubic_spline_batch(tw_steps, tw_vals, orig)      # (B, T)
        scale = (T - 1.0) / tw[:, -1:]
        warped = np.clip(scale * tw, 0.0, T - 1.0)                     # (B, T)
    else:
        warped = np.broadcast_to(orig, (B, T)).copy()
    # TODO(synk): assumes `warped` is monotone increasing per row (same
    #             assumption the np.interp-based reference makes).

    # vectorized searchsorted(warped[b], orig, 'right') - 1
    cnt = (warped[:, None, :] <= orig[None, :, None]).sum(axis=-1)     # (B, T)
    idx0 = np.clip(cnt - 1, 0, T - 2)
    x0 = np.take_along_axis(warped, idx0, axis=-1)
    x1 = np.take_along_axis(warped, idx0 + 1, axis=-1)
    denom = np.where(x1 > x0, x1 - x0, 1.0)
    frac = np.clip((orig[None, :] - x0) / denom, 0.0, 1.0)

    idx0 = idx0.reshape(N, C, T)
    frac = frac.reshape(N, C, T)

    # --- fold permutation + magnitude into the two taps
    perm_b = np.broadcast_to(perm_idx[:, None, :], (N, C, T))
    g0 = np.take_along_axis(perm_b, idx0, axis=-1).astype(np.int32)
    g1 = np.take_along_axis(perm_b, idx0 + 1, axis=-1).astype(np.int32)
    w0 = ((1.0 - frac) * np.take_along_axis(mag_curve, idx0, axis=-1)).astype(np.float32)
    w1 = (frac * np.take_along_axis(mag_curve, idx0 + 1, axis=-1)).astype(np.float32)

    return dict(
        g0=jnp.asarray(g0), g1=jnp.asarray(g1),
        w0=jnp.asarray(w0), w1=jnp.asarray(w1),
        # unfused pieces (returned for reference checking only)
        perm_idx=perm_idx.astype(np.int32),
        mag_curve=mag_curve.astype(np.float32),
        idx0=idx0.astype(np.int32),
        frac=frac.astype(np.float32),
    )


def augmenter_forward(x_ntc, key, *, jitt=True, jitt_std=0.03, nb=None, **aug_kwargs):
    """x_ntc: (N, T, C) float32, matching the PyTorch-side augmentation layout."""
    N, T, C = x_ntc.shape
    x_nct = jnp.transpose(x_ntc, (0, 2, 1)).astype(jnp.float32)

    # jitter noise (device-side, deterministic from key).
    # TODO(synk): could be generated in-kernel via pltpu.prng_random_bits to
    #             drop this DMA stream; kept as an input for exact verifiability.
    if jitt:
        noise = jitt_std * jax.random.normal(jax.random.fold_in(key, 1), (N, C, T),
                                             dtype=jnp.float32)
    else:
        noise = jnp.zeros((N, C, T), jnp.float32)

    # host-side fused-operator precompute; per-call randomness derived from key
    seed = int(jax.random.randint(jax.random.fold_in(key, 2), (), 0,
                                  np.iinfo(np.int32).max))
    ops = build_augmenter_operators(np.random.default_rng(seed), N, C, T, **aug_kwargs)

    out_nct = augmenter_pallas(x_nct, noise, ops["g0"], ops["g1"],
                               ops["w0"], ops["w1"], nb=nb)
    return jnp.transpose(out_nct, (0, 2, 1)), noise, ops


# ----------------------------------- main ----------------------------------- #
if __name__ == "__main__":
    key = jax.random.PRNGKey(0)
    N, T, C = 2, 128, 8                     # batch, time steps, channels
    x = jax.random.normal(jax.random.fold_in(key, 0), (N, T, C), dtype=jnp.float32)

    out, noise, ops = augmenter_forward(x, key)
    out = jax.block_until_ready(out)

    # pure-JAX reference of the original (unfused) op order:
    # jitter -> permutation -> magnitude warp -> time warp (2-tap lerp)
    x_nct = jnp.transpose(x, (0, 2, 1))
    y1 = x_nct + noise
    perm_b = jnp.broadcast_to(jnp.asarray(ops["perm_idx"])[:, None, :], (N, C, T))
    y2 = jnp.take_along_axis(y1, perm_b, axis=-1)
    y3 = y2 * jnp.asarray(ops["mag_curve"])
    i0 = jnp.asarray(ops["idx0"])
    fr = jnp.asarray(ops["frac"])
    y4 = ((1.0 - fr) * jnp.take_along_axis(y3, i0, axis=-1)
          + fr * jnp.take_along_axis(y3, i0 + 1, axis=-1))
    ref = jnp.transpose(y4, (0, 2, 1))

    np.testing.assert_allclose(np.asarray(out), np.asarray(ref), rtol=1e-4, atol=1e-4)
    assert out.shape == x.shape and out.dtype == x.dtype
    print("KERNEL_OK")
</pallas_src>

<mosaic_0001>
module attributes {stable_mosaic.version = 11 : i64} {
  func.func @augment_kernel(%arg0: i32, %arg1: memref<1x8x128xf32, #tpu.memory_space<vmem>>, %arg2: memref<1x8x128xf32, #tpu.memory_space<vmem>>, %arg3: memref<1x8x128xi32, #tpu.memory_space<vmem>>, %arg4: memref<1x8x128xi32, #tpu.memory_space<vmem>>, %arg5: memref<1x8x128xf32, #tpu.memory_space<vmem>>, %arg6: memref<1x8x128xf32, #tpu.memory_space<vmem>>, %arg7: memref<1x8x128xf32, #tpu.memory_space<vmem>>) attributes {dimension_semantics = [#tpu.dimension_semantics<parallel>], iteration_bounds = array<i64: 2>, scalar_prefetch = 0 : i64, scratch_operands = 0 : i64, tpu.core_type = #tpu.core_type<tc>, window_params = [{transform_indices = @transform_0, window_bounds = array<i64: 1, 8, 128>}, {transform_indices = @transform_1, window_bounds = array<i64: 1, 8, 128>}, {transform_indices = @transform_2, window_bounds = array<i64: 1, 8, 128>}, {transform_indices = @transform_3, window_bounds = array<i64: 1, 8, 128>}, {transform_indices = @transform_4, window_bounds = array<i64: 1, 8, 128>}, {transform_indices = @transform_5, window_bounds = array<i64: 1, 8, 128>}, {transform_indices = @transform_6, window_bounds = array<i64: 1, 8, 128>}]} {
    %c0 = arith.constant 0 : index
    %c0_0 = arith.constant 0 : index
    %c0_1 = arith.constant 0 : index
    %0 = vector.load %arg1[%c0, %c0_0, %c0_1] : memref<1x8x128xf32, #tpu.memory_space<vmem>>, vector<1x8x128xf32>
    %c0_2 = arith.constant 0 : index
    %c0_3 = arith.constant 0 : index
    %c0_4 = arith.constant 0 : index
    %1 = vector.load %arg2[%c0_2, %c0_3, %c0_4] : memref<1x8x128xf32, #tpu.memory_space<vmem>>, vector<1x8x128xf32>
    %2 = arith.addf %0, %1 : vector<1x8x128xf32>
    %3 = vector.shape_cast %2 : vector<1x8x128xf32> to vector<8x128xf32>
    %c0_5 = arith.constant 0 : index
    %c0_6 = arith.constant 0 : index
    %c0_7 = arith.constant 0 : index
    %4 = vector.load %arg3[%c0_5, %c0_6, %c0_7] : memref<1x8x128xi32, #tpu.memory_space<vmem>>, vector<1x8x128xi32>
    %5 = vector.shape_cast %4 : vector<1x8x128xi32> to vector<8x128xi32>
    %c0_8 = arith.constant 0 : index
    %c0_9 = arith.constant 0 : index
    %c0_10 = arith.constant 0 : index
    %6 = vector.load %arg4[%c0_8, %c0_9, %c0_10] : memref<1x8x128xi32, #tpu.memory_space<vmem>>, vector<1x8x128xi32>
    %7 = vector.shape_cast %6 : vector<1x8x128xi32> to vector<8x128xi32>
    %8 = vector.shape_cast %5 : vector<8x128xi32> to vector<8x128x1xi32>
    %9 = vector.shape_cast %8 : vector<8x128x1xi32> to vector<8x128xi32>
    %10 = tpu.dynamic_gather %3[%9] in [1] : vector<8x128xf32>, vector<8x128xi32> -> vector<8x128xf32>
    %11 = vector.shape_cast %7 : vector<8x128xi32> to vector<8x128x1xi32>
    %12 = vector.shape_cast %11 : vector<8x128x1xi32> to vector<8x128xi32>
    %13 = tpu.dynamic_gather %3[%12] in [1] : vector<8x128xf32>, vector<8x128xi32> -> vector<8x128xf32>
    %c0_11 = arith.constant 0 : index
    %c0_12 = arith.constant 0 : index
    %c0_13 = arith.constant 0 : index
    %14 = vector.load %arg5[%c0_11, %c0_12, %c0_13] : memref<1x8x128xf32, #tpu.memory_space<vmem>>, vector<1x8x128xf32>
    %15 = vector.shape_cast %14 : vector<1x8x128xf32> to vector<8x128xf32>
    %16 = arith.mulf %15, %10 : vector<8x128xf32>
    %c0_14 = arith.constant 0 : index
    %c0_15 = arith.constant 0 : index
    %c0_16 = arith.constant 0 : index
    %17 = vector.load %arg6[%c0_14, %c0_15, %c0_16] : memref<1x8x128xf32, #tpu.memory_space<vmem>>, vector<1x8x128xf32>
    %18 = vector.shape_cast %17 : vector<1x8x128xf32> to vector<8x128xf32>
    %19 = arith.mulf %18, %13 : vector<8x128xf32>
    %20 = arith.addf %16, %19 : vector<8x128xf32>
    %21 = vector.shape_cast %20 : vector<8x128xf32> to vector<1x8x128xf32>
    %c0_17 = arith.constant 0 : index
    %c0_18 = arith.constant 0 : index
    %c0_19 = arith.constant 0 : index
    %22 = vector.load %arg7[%c0_17, %c0_18, %c0_19] : memref<1x8x128xf32, #tpu.memory_space<vmem>>, vector<1x8x128xf32>
    tpu.vector_store %arg7[%c0_17, %c0_18, %c0_19], %21 {strides = array<i32>} : memref<1x8x128xf32, #tpu.memory_space<vmem>>, vector<1x8x128xf32>,
    return
  }
  func.func @transform_0(%arg0: i32) -> (i32, i32, i32) {
    %c0_i32 = arith.constant 0 : i32
    %c0_i32_0 = arith.constant 0 : i32
    %c0_i32_1 = arith.constant 0 : i32
    return %arg0, %c0_i32, %c0_i32_0 : i32, i32, i32
  }
  func.func @transform_1(%arg0: i32) -> (i32, i32, i32) {
    %c0_i32 = arith.constant 0 : i32
    %c0_i32_0 = arith.constant 0 : i32
    %c0_i32_1 = arith.constant 0 : i32
    return %arg0, %c0_i32, %c0_i32_0 : i32, i32, i32
  }
  func.func @transform_2(%arg0: i32) -> (i32, i32, i32) {
    %c0_i32 = arith.constant 0 : i32
    %c0_i32_0 = arith.constant 0 : i32
    %c0_i32_1 = arith.constant 0 : i32
    return %arg0, %c0_i32, %c0_i32_0 : i32, i32, i32
  }
  func.func @transform_3(%arg0: i32) -> (i32, i32, i32) {
    %c0_i32 = arith.constant 0 : i32
    %c0_i32_0 = arith.constant 0 : i32
    %c0_i32_1 = arith.constant 0 : i32
    return %arg0, %c0_i32, %c0_i32_0 : i32, i32, i32
  }
  func.func @transform_4(%arg0: i32) -> (i32, i32, i32) {
    %c0_i32 = arith.constant 0 : i32
    %c0_i32_0 = arith.constant 0 : i32
    %c0_i32_1 = arith.constant 0 : i32
    return %arg0, %c0_i32, %c0_i32_0 : i32, i32, i32
  }
  func.func @transform_5(%arg0: i32) -> (i32, i32, i32) {
    %c0_i32 = arith.constant 0 : i32
    %c0_i32_0 = arith.constant 0 : i32
    %c0_i32_1 = arith.constant 0 : i32
    return %arg0, %c0_i32, %c0_i32_0 : i32, i32, i32
  }
  func.func @transform_6(%arg0: i32) -> (i32, i32, i32) {
    %c0_i32 = arith.constant 0 : i32
    %c0_i32_0 = arith.constant 0 : i32
    %c0_i32_1 = arith.constant 0 : i32
    return %arg0, %c0_i32, %c0_i32_0 : i32, i32, i32
  }
}

</mosaic_0001>

<llo_original>
// kernel: tpu_custom_call.1
$region0: #{tpu_custom_call.1}
  #allocation0 [shape = 'u32[]', space=smem, size = 0x4, offset = 0x4, fixed_abs, tag = 'smem constant byte address 0x4 - core index']
  #allocation1 [shape = 'u32[144,128]{1,0:T(1,128)}', space=vmem, size = 0x12000, scoped, tag = 'internal scratch']
  %s0 = inlined_call_operand.hbm [shape: f32[2,8,128], index: 0, kind: input, shape index: {}]
  %s1 = inlined_call_operand.hbm [shape: f32[2,8,128], index: 1, kind: input, shape index: {}]
  %s2 = inlined_call_operand.hbm [shape: s32[2,8,128], index: 2, kind: input, shape index: {}]
  %s3 = inlined_call_operand.hbm [shape: s32[2,8,128], index: 3, kind: input, shape index: {}]
  %s4 = inlined_call_operand.hbm [shape: f32[2,8,128], index: 4, kind: input, shape index: {}]
  %s5 = inlined_call_operand.vmem [shape: f32[2,8,128], index: 5, kind: input, shape index: {}]
  %s6 = inlined_call_operand.hbm [shape: f32[2,8,128], index: 6, kind: output, shape index: {}]
  %s7 = sld [smem:[#allocation0]]
  $region77: #{tpu_custom_call.1} parent=0
    _
  %s9 = ssub.s32 1, %s7
  %s10 = scalar_select 0, %s9, %s7
  $region1: #{tpu_custom_call.1} parent=0
    #allocation2 [shape = 'u8[8192]{0}', space=vmem, size = 0x2000, scoped, tag = 'input window, operand 0']
    #allocation3 [shape = 's32[2]{0}', space=sflag, size = 0x8, scoped, tag = 'scoped memory for tpu_custom_call.1']
    #allocation4 [shape = 's32[2]{0}', space=sflag, size = 0x8, scoped, tag = 'scoped memory for tpu_custom_call.1']
    #allocation5 [shape = 'u8[8192]{0}', space=vmem, size = 0x2000, scoped, tag = 'input window, operand 1']
    #allocation6 [shape = 's32[2]{0}', space=sflag, size = 0x8, scoped, tag = 'scoped memory for tpu_custom_call.1']
    #allocation7 [shape = 'u8[8192]{0}', space=vmem, size = 0x2000, scoped, tag = 'input window, operand 2']
    #allocation8 [shape = 'u8[8192]{0}', space=vmem, size = 0x2000, scoped, tag = 'input window, operand 3']
    #allocation9 [shape = 's32[2]{0}', space=sflag, size = 0x8, scoped, tag = 'scoped memory for tpu_custom_call.1']
    #allocation10 [shape = 'u8[8192]{0}', space=vmem, size = 0x2000, scoped, tag = 'input window, operand 4']
    #allocation11 [shape = 'u8[8192]{0}', space=vmem, size = 0x2000, scoped, tag = 'output window, operand 0']
    %11 = vsyncpa [#allocation3], 0
    %s12 = scalar_lea.sflag [#allocation3], 1
    %13 = vsyncpa %s12, 0
    %14 = vsyncpa [#allocation6], 0
    %s15 = scalar_lea.sflag [#allocation6], 1
    %16 = vsyncpa %s15, 0
    %17 = vsyncpa [#allocation9], 0
    %s18 = scalar_lea.sflag [#allocation9], 1
    %19 = vsyncpa %s18, 0
    %20 = vsyncpa [#allocation4], 0
    %s21 = scalar_lea.sflag [#allocation4], 1
    %22 = vsyncpa %s21, 0
    loop: start=0, step=1, limit=4
    $region2: #{tpu_custom_call.1} parent=1 // loop_pre_header
      _
    $region3: #{tpu_custom_call.1} parent=1 // loop_header
      %s24 = sphi 0, %s28
      %p25 = scmp.ge.s32.totalorder %s24, 4
      %s34 = sphi 0, %s36
      %s37 = sphi 0, %s34
      %s38 = sphi 0, %s37
      %s54 = sphi 0, %s38
      %s60 = sphi 0, %s62
      %s63 = sphi 0, %s60
      %s64 = sphi 0, %s63
      %s80 = sphi 0, %s64
      %s86 = sphi 0, %s88
      %s89 = sphi 0, %s86
      %s90 = sphi 0, %s89
      %s106 = sphi 0, %s90
      %s112 = sphi 0, %s114
      %s115 = sphi 0, %s112
      %s116 = sphi 0, %s115
      %s132 = sphi 0, %s116
      %s138 = sphi 0, %s140
      %s141 = sphi 0, %s138
      %s142 = sphi 0, %s141
      %s158 = sphi 0, %s142
      %s164 = sphi 0, %s166
      %s167 = sphi 0, %s164
      %s168 = sphi 0, %s167
      %s184 = sphi 0, %s168
      %s190 = sphi 0, %s192
      %s193 = sphi 0, %s190
      %s194 = sphi 0, %s193
      %s210 = sphi 0, %s194
    $region4: #{tpu_custom_call.1} parent=1 // loop_header_branch
      %27 = sbr.rel (%p25) target = $region8
    $region5: #{tpu_custom_call.1} parent=1 // loop_body
      %s29 = ssub.s32 %s24, 1
      %s30 = ssub.s32 %s24, 2
      %s31 = sadd.s32 %s24, 1
      %s32 = ssub.s32 %s24, %s31
      %p33 = scmp.eq.s32.totalorder %s32, 0
      %s35 = sadd.s32 %s34, 1
      %s36 = scalar_select %p33, %s34, %s35
      %p39 = pneg %p33
      %p40 = scmp.eq.s32.totalorder %s24, 1
      %p41 = por %p39, %p40
      %p42 = scmp.ne.s32.totalorder %s34, %s37
      %p43 = scmp.eq.s32.totalorder %s24, 0
      %p44 = por %p42, %p43
      %p45 = scmp.ne.s32.totalorder %s34, %s37
      %p46 = scmp.eq.s32.totalorder %s29, 1
      %p47 = por %p45, %p46
      %p48 = scmp.ne.s32.totalorder %s37, %s38
      %p49 = scmp.eq.s32.totalorder %s29, 0
      %p50 = por %p48, %p49
      %p51 = scmp.ne.s32.totalorder %s37, %s38
      %p52 = scmp.eq.s32.totalorder %s30, 1
      %p53 = por %p51, %p52
      %p55 = scmp.ne.s32.totalorder %s38, %s54
      %p56 = scmp.eq.s32.totalorder %s30, 0
      %p57 = por %p55, %p56
      %s58 = ssub.s32 %s24, %s31
      %p59 = scmp.eq.s32.totalorder %s58, 0
      %s61 = sadd.s32 %s60, 1
      %s62 = scalar_select %p59, %s60, %s61
      %p65 = pneg %p59
      %p66 = scmp.eq.s32.totalorder %s24, 1
      %p67 = por %p65, %p66
      %p68 = scmp.ne.s32.totalorder %s60, %s63
      %p69 = scmp.eq.s32.totalorder %s24, 0
      %p70 = por %p68, %p69
      %p71 = scmp.ne.s32.totalorder %s60, %s63
      %p72 = scmp.eq.s32.totalorder %s29, 1
      %p73 = por %p71, %p72
      %p74 = scmp.ne.s32.totalorder %s63, %s64
      %p75 = scmp.eq.s32.totalorder %s29, 0
      %p76 = por %p74, %p75
      %p77 = scmp.ne.s32.totalorder %s63, %s64
      %p78 = scmp.eq.s32.totalorder %s30, 1
      %p79 = por %p77, %p78
      %p81 = scmp.ne.s32.totalorder %s64, %s80
      %p82 = scmp.eq.s32.totalorder %s30, 0
      %p83 = por %p81, %p82
      %s84 = ssub.s32 %s24, %s31
      %p85 = scmp.eq.s32.totalorder %s84, 0
      %s87 = sadd.s32 %s86, 1
      %s88 = scalar_select %p85, %s86, %s87
      %p91 = pneg %p85
      %p92 = scmp.eq.s32.totalorder %s24, 1
      %p93 = por %p91, %p92
      %p94 = scmp.ne.s32.totalorder %s86, %s89
      %p95 = scmp.eq.s32.totalorder %s24, 0
      %p96 = por %p94, %p95
      %p97 = scmp.ne.s32.totalorder %s86, %s89
      %p98 = scmp.eq.s32.totalorder %s29, 1
      %p99 = por %p97, %p98
      %p100 = scmp.ne.s32.totalorder %s89, %s90
      %p101 = scmp.eq.s32.totalorder %s29, 0
      %p102 = por %p100, %p101
      %p103 = scmp.ne.s32.totalorder %s89, %s90
      %p104 = scmp.eq.s32.totalorder %s30, 1
      %p105 = por %p103, %p104
      %p107 = scmp.ne.s32.totalorder %s90, %s106
      %p108 = scmp.eq.s32.totalorder %s30, 0
      %p109 = por %p107, %p108
      %s110 = ssub.s32 %s24, %s31
      %p111 = scmp.eq.s32.totalorder %s110, 0
      %s113 = sadd.s32 %s112, 1
      %s114 = scalar_select %p111, %s112, %s113
      %p117 = pneg %p111
      %p118 = scmp.eq.s32.totalorder %s24, 1
      %p119 = por %p117, %p118
      %p120 = scmp.ne.s32.totalorder %s112, %s115
      %p121 = scmp.eq.s32.totalorder %s24, 0
      %p122 = por %p120, %p121
      %p123 = scmp.ne.s32.totalorder %s112, %s115
      %p124 = scmp.eq.s32.totalorder %s29, 1
      %p125 = por %p123, %p124
      %p126 = scmp.ne.s32.totalorder %s115, %s116
      %p127 = scmp.eq.s32.totalorder %s29, 0
      %p128 = por %p126, %p127
      %p129 = scmp.ne.s32.totalorder %s115, %s116
      %p130 = scmp.eq.s32.totalorder %s30, 1
      %p131 = por %p129, %p130
      %p133 = scmp.ne.s32.totalorder %s116, %s132
      %p134 = scmp.eq.s32.totalorder %s30, 0
      %p135 = por %p133, %p134
      %s136 = ssub.s32 %s24, %s31
      %p137 = scmp.eq.s32.totalorder %s136, 0
      %s139 = sadd.s32 %s138, 1
      %s140 = scalar_select %p137, %s138, %s139
      %p143 = pneg %p137
      %p144 = scmp.eq.s32.totalorder %s24, 1
      %p145 = por %p143, %p144
      %p146 = scmp.ne.s32.totalorder %s138, %s141
      %p147 = scmp.eq.s32.totalorder %s24, 0
      %p148 = por %p146, %p147
      %p149 = scmp.ne.s32.totalorder %s138, %s141
      %p150 = scmp.eq.s32.totalorder %s29, 1
      %p151 = por %p149, %p150
      %p152 = scmp.ne.s32.totalorder %s141, %s142
      %p153 = scmp.eq.s32.totalorder %s29, 0
      %p154 = por %p152, %p153
      %p155 = scmp.ne.s32.totalorder %s141, %s142
      %p156 = scmp.eq.s32.totalorder %s30, 1
      %p157 = por %p155, %p156
      %p159 = scmp.ne.s32.totalorder %s142, %s158
      %p160 = scmp.eq.s32.totalorder %s30, 0
      %p161 = por %p159, %p160
      %s162 = ssub.s32 %s24, %s31
      %p163 = scmp.eq.s32.totalorder %s162, 0
      %s165 = sadd.s32 %s164, 1
      %s166 = scalar_select %p163, %s164, %s165
      %p169 = pneg %p163
      %p170 = scmp.eq.s32.totalorder %s24, 1
      %p171 = por %p169, %p170
      %p172 = scmp.ne.s32.totalorder %s164, %s167
      %p173 = scmp.eq.s32.totalorder %s24, 0
      %p174 = por %p172, %p173
      %p175 = scmp.ne.s32.totalorder %s164, %s167
      %p176 = scmp.eq.s32.totalorder %s29, 1
      %p177 = por %p175, %p176
      %p178 = scmp.ne.s32.totalorder %s167, %s168
      %p179 = scmp.eq.s32.totalorder %s29, 0
      %p180 = por %p178, %p179
      %p181 = scmp.ne.s32.totalorder %s167, %s168
      %p182 = scmp.eq.s32.totalorder %s30, 1
      %p183 = por %p181, %p182
      %p185 = scmp.ne.s32.totalorder %s168, %s184
      %p186 = scmp.eq.s32.totalorder %s30, 0
      %p187 = por %p185, %p186
      %s188 = ssub.s32 %s24, %s31
      %p189 = scmp.eq.s32.totalorder %s188, 0
      %s191 = sadd.s32 %s190, 1
      %s192 = scalar_select %p189, %s190, %s191
      %p195 = pneg %p189
      %p196 = scmp.eq.s32.totalorder %s24, 1
      %p197 = por %p195, %p196
      %p198 = scmp.ne.s32.totalorder %s190, %s193
      %p199 = scmp.eq.s32.totalorder %s24, 0
      %p200 = por %p198, %p199
      %p201 = scmp.ne.s32.totalorder %s190, %s193
      %p202 = scmp.eq.s32.totalorder %s29, 1
      %p203 = por %p201, %p202
      %p204 = scmp.ne.s32.totalorder %s193, %s194
      %p205 = scmp.eq.s32.totalorder %s29, 0
      %p206 = por %p204, %p205
      %p207 = scmp.ne.s32.totalorder %s193, %s194
      %p208 = scmp.eq.s32.totalorder %s30, 1
      %p209 = por %p207, %p208
      %p211 = scmp.ne.s32.totalorder %s194, %s210
      %p212 = scmp.eq.s32.totalorder %s30, 0
      %p213 = por %p211, %p212
      %p214 = scmp.le.s32.totalorder 1, %s24
      %p215 = scmp.lt.s32.totalorder %s24, 3
      %p216 = pnand %p214, %p215
      %p217 = pneg %p216
      // Predicated region
      $region9: #{tpu_custom_call.1} parent=5 // pred_check
        _
      $region10: #{tpu_custom_call.1} parent=5 // pred_check_branch
        %219 = sbr.rel (%p216) target = $region12
      $region11: #{tpu_custom_call.1} parent=5 // pred_region
        %s220 = ssub.s32 %s24, 1
      $region12: #{tpu_custom_call.1} parent=5 // pred_fallthru
        _
      %p221 = scmp.lt.s32.totalorder %s24, 2
      // Predicated region
      $region13: #{tpu_custom_call.1} parent=5 // pred_check
        %p222 = pneg %p221
      $region14: #{tpu_custom_call.1} parent=5 // pred_check_branch
        %224 = sbr.rel (%p222) target = $region16
      $region15: #{tpu_custom_call.1} parent=5 // pred_region
        // Predicated region
        $region17: #{tpu_custom_call.1} parent=15 // pred_check
          %p225 = pneg %p44
        $region18: #{tpu_custom_call.1} parent=15 // pred_check_branch
          %227 = sbr.rel (%p225) target = $region20
        $region19: #{tpu_custom_call.1} parent=15 // pred_region
          %s228 = sand.u32 %s34, 1
          %s229 = scalar_lea.sflag [#allocation3], %s228
          %s230 = sand.u32 %s34, 1
          %s231 = smul.addr %s230, 8
          %s232 = scalar_lea.vmem [#allocation2], %s231
          %s234 = ssub.s32 128, 128
          %235 = vsyncadd %s229, %s234
          %s236 = smul.addr %s24, 128
          %s237 = scalar_lea.hbm %s0, %s236
          %s239 = sshll.u32 %s232, 4
          %s240 = int_to_ptr.vmem [resolvable:$true] %s239
          %242 = dma.hbm_to_vmem [thread:$0]  %s237, 128, %s240, %s229
        $region20: #{tpu_custom_call.1} parent=15 // pred_fallthru
          _
        // Predicated region
        $region21: #{tpu_custom_call.1} parent=15 // pred_check
          %p243 = pneg %p70
        $region22: #{tpu_custom_call.1} parent=15 // pred_check_branch
          %245 = sbr.rel (%p243) target = $region24
        $region23: #{tpu_custom_call.1} parent=15 // pred_region
          %s246 = sand.u32 %s24, 1
          %s247 = scalar_lea.sflag [#allocation6], %s246
          %s248 = sand.u32 %s60, 1
          %s249 = smul.addr %s248, 8
          %s250 = scalar_lea.vmem [#allocation5], %s249
          %s252 = ssub.s32 128, 128
          %253 = vsyncadd %s247, %s252
          %s254 = smul.addr %s24, 128
          %s255 = scalar_lea.hbm %s1, %s254
          %s257 = sshll.u32 %s250, 4
          %s258 = int_to_ptr.vmem [resolvable:$true] %s257
          %260 = dma.hbm_to_vmem [thread:$0]  %s255, 128, %s258, %s247
        $region24: #{tpu_custom_call.1} parent=15 // pred_fallthru
          _
        // Predicated region
        $region25: #{tpu_custom_call.1} parent=15 // pred_check
          %p261 = pneg %p96
        $region26: #{tpu_custom_call.1} parent=15 // pred_check_branch
          %263 = sbr.rel (%p261) target = $region28
        $region27: #{tpu_custom_call.1} parent=15 // pred_region
          %s264 = sand.u32 %s24, 1
          %s265 = scalar_lea.sflag [#allocation6], %s264
          %s266 = sand.u32 %s86, 1
          %s267 = smul.addr %s266, 8
          %s268 = scalar_lea.vmem [#allocation7], %s267
          %s270 = ssub.s32 128, 128
          %271 = vsyncadd %s265, %s270
          %s272 = smul.addr %s24, 128
          %s273 = scalar_lea.hbm %s2, %s272
          %s275 = sshll.u32 %s268, 4
          %s276 = int_to_ptr.vmem [resolvable:$true] %s275
          %278 = dma.hbm_to_vmem [thread:$0]  %s273, 128, %s276, %s265
        $region28: #{tpu_custom_call.1} parent=15 // pred_fallthru
          _
        // Predicated region
        $region29: #{tpu_custom_call.1} parent=15 // pred_check
          %p279 = pneg %p122
        $region30: #{tpu_custom_call.1} parent=15 // pred_check_branch
          %281 = sbr.rel (%p279) target = $region32
        $region31: #{tpu_custom_call.1} parent=15 // pred_region
          %s282 = sand.u32 %s24, 1
          %s283 = scalar_lea.sflag [#allocation9], %s282
          %s284 = sand.u32 %s112, 1
          %s285 = smul.addr %s284, 8
          %s286 = scalar_lea.vmem [#allocation8], %s285
          %s288 = ssub.s32 128, 128
          %289 = vsyncadd %s283, %s288
          %s290 = smul.addr %s24, 128
          %s291 = scalar_lea.hbm %s3, %s290
          %s293 = sshll.u32 %s286, 4
          %s294 = int_to_ptr.vmem [resolvable:$true] %s293
          %296 = dma.hbm_to_vmem [thread:$0]  %s291, 128, %s294, %s283
        $region32: #{tpu_custom_call.1} parent=15 // pred_fallthru
          _
        // Predicated region
        $region33: #{tpu_custom_call.1} parent=15 // pred_check
          %p297 = pneg %p148
        $region34: #{tpu_custom_call.1} parent=15 // pred_check_branch
          %299 = sbr.rel (%p297) target = $region36
        $region35: #{tpu_custom_call.1} parent=15 // pred_region
          %s300 = sand.u32 %s24, 1
          %s301 = scalar_lea.sflag [#allocation9], %s300
          %s302 = sand.u32 %s138, 1
          %s303 = smul.addr %s302, 8
          %s304 = scalar_lea.vmem [#allocation10], %s303
          %s306 = ssub.s32 128, 128
          %307 = vsyncadd %s301, %s306
          %s308 = smul.addr %s24, 128
          %s309 = scalar_lea.hbm %s4, %s308
          %s311 = sshll.u32 %s304, 4
          %s312 = int_to_ptr.vmem [resolvable:$true] %s311
          %314 = dma.hbm_to_vmem [thread:$0]  %s309, 128, %s312, %s301
        $region36: #{tpu_custom_call.1} parent=15 // pred_fallthru
          _
        // Predicated region
        $region37: #{tpu_custom_call.1} parent=15 // pred_check
          %p315 = pneg %p174
        $region38: #{tpu_custom_call.1} parent=15 // pred_check_branch
          %317 = sbr.rel (%p315) target = $region40
        $region39: #{tpu_custom_call.1} parent=15 // pred_region
          %p318 = scmp.lt.s32.totalorder %s24, 1
          %s319 = scalar_select %p318, %s24, 1
          %s320 = smul.addr %s319, 8
          %s321 = scalar_lea.vmem %s5, %s320
        $region40: #{tpu_custom_call.1} parent=15 // pred_fallthru
          _
      $region16: #{tpu_custom_call.1} parent=5 // pred_fallthru
        _
      %p322 = scmp.le.s32.totalorder 1, %s24
      %p323 = scmp.lt.s32.totalorder %s24, 3
      %p324 = pnand %p322, %p323
      %p325 = pneg %p324
      // Predicated region
      $region41: #{tpu_custom_call.1} parent=5 // pred_check
        _
      $region42: #{tpu_custom_call.1} parent=5 // pred_check_branch
        %327 = sbr.rel (%p324) target = $region44
      $region43: #{tpu_custom_call.1} parent=5 // pred_region
        %s328 = ssub.s32 %s24, 1
        %s329 = sand.u32 %s37, 1
        %s330 = scalar_lea.sflag [#allocation3], %s329
        %s331 = sand.u32 %s37, 1
        %s332 = smul.addr %s331, 8
        %s333 = scalar_lea.vmem [#allocation2], %s332
        // Predicated region
        $region45: #{tpu_custom_call.1} parent=43 // pred_check
          %p334 = pneg %p50
        $region46: #{tpu_custom_call.1} parent=43 // pred_check_branch
          %336 = sbr.rel (%p334) target = $region48
        $region47: #{tpu_custom_call.1} parent=43 // pred_region
          %337 = dma.done %s330, 128
        $region48: #{tpu_custom_call.1} parent=43 // pred_fallthru
          _
        %s338 = sand.u32 %s29, 1
        %s339 = scalar_lea.sflag [#allocation6], %s338
        %s340 = sand.u32 %s63, 1
        %s341 = smul.addr %s340, 8
        %s342 = scalar_lea.vmem [#allocation5], %s341
        // Predicated region
        $region49: #{tpu_custom_call.1} parent=43 // pred_check
          %p343 = pneg %p76
        $region50: #{tpu_custom_call.1} parent=43 // pred_check_branch
          %345 = sbr.rel (%p343) target = $region52
        $region51: #{tpu_custom_call.1} parent=43 // pred_region
          %346 = dma.done %s339, 128
        $region52: #{tpu_custom_call.1} parent=43 // pred_fallthru
          _
        %s347 = sand.u32 %s29, 1
        %s348 = scalar_lea.sflag [#allocation6], %s347
        %s349 = sand.u32 %s89, 1
        %s350 = smul.addr %s349, 8
        %s351 = scalar_lea.vmem [#allocation7], %s350
        // Predicated region
        $region53: #{tpu_custom_call.1} parent=43 // pred_check
          %p352 = pneg %p102
        $region54: #{tpu_custom_call.1} parent=43 // pred_check_branch
          %354 = sbr.rel (%p352) target = $region56
        $region55: #{tpu_custom_call.1} parent=43 // pred_region
          %355 = dma.done %s348, 128
        $region56: #{tpu_custom_call.1} parent=43 // pred_fallthru
          _
        %s356 = sand.u32 %s29, 1
        %s357 = scalar_lea.sflag [#allocation9], %s356
        %s358 = sand.u32 %s115, 1
        %s359 = smul.addr %s358, 8
        %s360 = scalar_lea.vmem [#allocation8], %s359
        // Predicated region
        $region57: #{tpu_custom_call.1} parent=43 // pred_check
          %p361 = pneg %p128
        $region58: #{tpu_custom_call.1} parent=43 // pred_check_branch
          %363 = sbr.rel (%p361) target = $region60
        $region59: #{tpu_custom_call.1} parent=43 // pred_region
          %364 = dma.done %s357, 128
        $region60: #{tpu_custom_call.1} parent=43 // pred_fallthru
          _
        %s365 = sand.u32 %s29, 1
        %s366 = scalar_lea.sflag [#allocation9], %s365
        %s367 = sand.u32 %s141, 1
        %s368 = smul.addr %s367, 8
        %s369 = scalar_lea.vmem [#allocation10], %s368
        // Predicated region
        $region61: #{tpu_custom_call.1} parent=43 // pred_check
          %p370 = pneg %p154
        $region62: #{tpu_custom_call.1} parent=43 // pred_check_branch
          %372 = sbr.rel (%p370) target = $region64
        $region63: #{tpu_custom_call.1} parent=43 // pred_region
          %373 = dma.done %s366, 128
        $region64: #{tpu_custom_call.1} parent=43 // pred_fallthru
          _
        %s374 = sand.u32 %s37, 1
        %s375 = scalar_lea.sflag [#allocation3], %s374
        %s376 = sand.u32 %s37, 1
        %s377 = smul.addr %s376, 8
        %s378 = scalar_lea.vmem [#allocation2], %s377
        %p379 = pneg %p50
        %p380 = pneg %p47
        %s381 = sand.u32 %s29, 1
        %s382 = scalar_lea.sflag [#allocation6], %s381
        %s383 = sand.u32 %s63, 1
        %s384 = smul.addr %s383, 8
        %s385 = scalar_lea.vmem [#allocation5], %s384
        %p386 = pneg %p76
        %p387 = pneg %p73
        %s388 = sand.u32 %s29, 1
        %s389 = scalar_lea.sflag [#allocation6], %s388
        %s390 = sand.u32 %s89, 1
        %s391 = smul.addr %s390, 8
        %s392 = scalar_lea.vmem [#allocation7], %s391
        %p393 = pneg %p102
        %p394 = pneg %p99
        %s395 = sand.u32 %s29, 1
        %s396 = scalar_lea.sflag [#allocation9], %s395
        %s397 = sand.u32 %s115, 1
        %s398 = smul.addr %s397, 8
        %s399 = scalar_lea.vmem [#allocation8], %s398
        %p400 = pneg %p128
        %p401 = pneg %p125
        %s402 = sand.u32 %s29, 1
        %s403 = scalar_lea.sflag [#allocation9], %s402
        %s404 = sand.u32 %s141, 1
        %s405 = smul.addr %s404, 8
        %s406 = scalar_lea.vmem [#allocation10], %s405
        %p407 = pneg %p154
        %p408 = pneg %p151
        %p409 = scmp.lt.s32.totalorder %s29, 1
        %s410 = scalar_select %p409, %s29, 1
        %s411 = smul.addr %s410, 8
        %s412 = scalar_lea.vmem %s5, %s411
        %p413 = pneg %p180
        %p414 = pneg %p177
        %p415 = pneg %p206
        %p416 = pneg %p203
        %s417 = sand.u32 %s193, 1
        %s418 = scalar_lea.sflag [#allocation4], %s417
        %s419 = sand.u32 %s193, 1
        %s420 = smul.addr %s419, 8
        %s421 = scalar_lea.vmem [#allocation11], %s420
        %p422 = scmp.lt.s32.totalorder %s29, 1
        %s423 = scalar_select %p422, %s29, 1
        %s424 = smul.addr %s423, 8
        %s425 = scalar_lea.vmem %s5, %s424
        %v426 = vld [vmem:[%s333] sm:$0xff]
        %v427 = vld [vmem:[%s342] sm:$0xff]
        %v428 = vadd.f32 %v426, %v427
        %v429 = vld [vmem:[%s351] sm:$0xff]
        %v430 = vld [vmem:[%s360] sm:$0xff]
        %431 = vset.pattern.permute.xlu0 %v429
        %432 = vperm.xlu0 %431, %v428
        %v433 = vpop.permute.xlu0 %432
        %434 = vset.pattern.permute.xlu0 %v430
        %435 = vperm.xlu0 %434, %v428
        %v436 = vpop.permute.xlu0 %435
        %v437 = vld [vmem:[%s369] sm:$0xff]
        %v438 = vmul.f32 %v437, %v433
        %v439 = vld [vmem:[%s425] sm:$0xff]
        %v440 = vmul.f32 %v439, %v436
        %v441 = vadd.f32 %v438, %v440
        %442 = vst [vmem:[%s421] sm:$0xff] %v441
        %s443 = sand.u32 %s193, 1
        %s444 = scalar_lea.sflag [#allocation4], %s443
        %s445 = sand.u32 %s193, 1
        %s446 = smul.addr %s445, 8
        %s447 = scalar_lea.vmem [#allocation11], %s446
        // Predicated region
        $region65: #{tpu_custom_call.1} parent=43 // pred_check
          %p448 = pneg %p203
        $region66: #{tpu_custom_call.1} parent=43 // pred_check_branch
          %450 = sbr.rel (%p448) target = $region68
        $region67: #{tpu_custom_call.1} parent=43 // pred_region
          %s452 = ssub.s32 128, 128
          %453 = vsyncadd %s444, %s452
          %s454 = smul.addr %s29, 128
          %s455 = scalar_lea.hbm %s6, %s454
          %s457 = sshll.u32 %s447, 4
          %s458 = int_to_ptr.vmem [resolvable:$true] %s457
          %460 = dma.vmem_to_hbm [thread:$0]  %s458, 128, %s455, %s444
        $region68: #{tpu_custom_call.1} parent=43 // pred_fallthru
          _
      $region44: #{tpu_custom_call.1} parent=5 // pred_fallthru
        _
      %p461 = scmp.le.s32.totalorder 2, %s24
      // Predicated region
      $region69: #{tpu_custom_call.1} parent=5 // pred_check
        %p462 = pneg %p461
      $region70: #{tpu_custom_call.1} parent=5 // pred_check_branch
        %464 = sbr.rel (%p462) target = $region72
      $region71: #{tpu_custom_call.1} parent=5 // pred_region
        %s465 = ssub.s32 %s24, 2
        // Predicated region
        $region73: #{tpu_custom_call.1} parent=71 // pred_check
          %p466 = pneg %p209
        $region74: #{tpu_custom_call.1} parent=71 // pred_check_branch
          %468 = sbr.rel (%p466) target = $region76
        $region75: #{tpu_custom_call.1} parent=71 // pred_region
          %s469 = sand.u32 %s194, 1
          %s470 = scalar_lea.sflag [#allocation4], %s469
          %s471 = sand.u32 %s194, 1
          %s472 = smul.addr %s471, 8
          %s473 = scalar_lea.vmem [#allocation11], %s472
          %474 = dma.done %s470, 128
        $region76: #{tpu_custom_call.1} parent=71 // pred_fallthru
          _
      $region72: #{tpu_custom_call.1} parent=5 // pred_fallthru
        _
    $region6: #{tpu_custom_call.1} parent=1 // loop_footer
      %s28 = sadd.s32 1, %s24
    $region7: #{tpu_custom_call.1} parent=1 // loop_footer_branch
      %23 = sbr.rel target = $region3
    $region8: #{tpu_custom_call.1} parent=1 // loop_exit
      _
    %475 = vsyncpa [#allocation3], 1
    %s476 = scalar_lea.sflag [#allocation3], 1
    %477 = vsyncpa %s476, 1
    %478 = vsyncpa [#allocation6], 1
    %s479 = scalar_lea.sflag [#allocation6], 1
    %480 = vsyncpa %s479, 1
    %481 = vsyncpa [#allocation9], 1
    %s482 = scalar_lea.sflag [#allocation9], 1
    %483 = vsyncpa %s482, 1
    %484 = vsyncpa [#allocation4], 1
    %s485 = scalar_lea.sflag [#allocation4], 1
    %486 = vsyncpa %s485, 1

</llo_original>
